<compile_context>
chip_gen: v7x
topology: tpu7x:2x2x1
jax: 0.10.0
libtpu: 0.0.40
codegen_flags: <defaults>
</compile_context>

<pallas_src>
import jax
import jax.numpy as jnp
from jax.experimental import pallas as pl
from jax.experimental.pallas import tpu as pltpu

K = 13
PAD = 6
LANE = 128


def resblock_kernel(x_ref, w1_ref, b1_ref, w2_ref, b2_ref, o_ref):
    """One batch element per grid step.

    x_ref : (1, C, Lp) input, zero-padded on the right from L up to Lp (multiple of
            128, Lp >= L + PAD).  The raw (un-ReLU'd) x for the residual is [:, :, :L].
    w1_ref: (C, K*C) conv1 weights, flattened so [co, k*C + ci] = w1[co, ci, k].
    b1_ref: (C, 1) conv1 bias.
    w2_ref: (C, K*C) conv2 weights, pre-scaled by 0.3.
    b2_ref: (C, 1) conv2 bias, pre-scaled by 0.3.
    o_ref : (1, C, L) output block.
    """
    C = x_ref.shape[1]
    Lp = x_ref.shape[2]
    L = o_ref.shape[2]

    x = x_ref[0]                          # (C, Lp) raw input (residual path)
    xr = jnp.maximum(x, 0.0)              # ReLU; the zero padding is invariant

    def shifted_stack(v):
        # Row (k*C + ci) holds v[ci, l + k - PAD].  The circular wrap only reads from /
        # lands in the zero lanes beyond L because Lp >= L + PAD, so this reproduces
        # zero-padded 'same' convolution exactly for output lanes [0, L).
        rows = []
        for k in range(K):
            s = (PAD - k) % Lp
            rows.append(v if s == 0 else pltpu.roll(v, shift=s, axis=1))
        return jnp.concatenate(rows, axis=0)          # (K*C, Lp)

    # Conv1: a single matmul with the taps folded into the contraction (f32 accumulate).
    h = jnp.dot(w1_ref[...], shifted_stack(xr),
                preferred_element_type=jnp.float32) + b1_ref[...]
    h = jnp.maximum(h, 0.0)

    # Zero the lanes beyond the true length so conv2's circular shifts see zeros there.
    lane = jax.lax.broadcasted_iota(jnp.int32, (C, Lp), 1)
    h = jnp.where(lane < L, h, 0.0)

    # Conv2 (weights/bias already carry the 0.3 residual scale).
    y = jnp.dot(w2_ref[...], shifted_stack(h),
                preferred_element_type=jnp.float32) + b2_ref[...]

    # Residual add with the original (un-ReLU'd) x; store only the valid L lanes.
    o_ref[0] = (x[:, :L] + y[:, :L]).astype(o_ref.dtype)


def resblock_forward(x_ncl, w1, b1, w2, b2, *, res_scale=0.3):
    """x_ncl: (N, C, L) float32 (PyTorch NCL).  Weights in PyTorch Conv1d layout:
    w1: (Cout, Cin, K), b1: (Cout,), w2: (Cout, Cout, K), b2: (Cout,)."""
    N, Cin, L = x_ncl.shape
    Cout = w1.shape[0]
    assert Cin == Cout, "residual add requires input_nc == output_nc"
    assert w1.shape[2] == K and w2.shape[2] == K

    # Pad the lane axis to a multiple of 128 with at least PAD trailing zeros; this is
    # what lets the in-kernel circular shifts act like zero padding.
    Lp = ((L + PAD + LANE - 1) // LANE) * LANE
    x_pad = jnp.pad(x_ncl.astype(jnp.float32), ((0, 0), (0, 0), (0, Lp - L)))
    # TODO(synk): for very long L, add an L-tile grid axis (512-2048 lanes per tile)
    # with a 2*2*PAD halo window instead of keeping the full padded length per block.

    # Flatten taps into the contraction dim: [co, k*Cin + ci] = w[co, ci, k].
    w1_2d = jnp.transpose(w1, (0, 2, 1)).reshape(Cout, K * Cin).astype(jnp.float32)
    w2_2d = (res_scale * jnp.transpose(w2, (0, 2, 1))).reshape(Cout, K * Cout)
    w2_2d = w2_2d.astype(jnp.float32)
    b1_c = b1.reshape(Cout, 1).astype(jnp.float32)
    b2_c = (res_scale * b2).reshape(Cout, 1).astype(jnp.float32)

    out = pl.pallas_call(
        resblock_kernel,
        out_shape=jax.ShapeDtypeStruct((N, Cout, L), x_ncl.dtype),
        grid=(N,),
        in_specs=[
            pl.BlockSpec((1, Cin, Lp), lambda n: (n, 0, 0)),
            pl.BlockSpec((Cout, K * Cin), lambda n: (0, 0)),
            pl.BlockSpec((Cout, 1), lambda n: (0, 0)),
            pl.BlockSpec((Cout, K * Cout), lambda n: (0, 0)),
            pl.BlockSpec((Cout, 1), lambda n: (0, 0)),
        ],
        out_specs=pl.BlockSpec((1, Cout, L), lambda n: (n, 0, 0)),
        compiler_params=pltpu.CompilerParams(
            dimension_semantics=("parallel",),
            vmem_limit_bytes=32 * 1024 * 1024,
        ),
    )(x_pad, w1_2d, b1_c, w2_2d, b2_c)
    return out


def _reference_forward(x_ncl, w1, b1, w2, b2):
    """Pure-JAX reference (lax conv) mirroring the PyTorch module."""
    def conv1d(x, w, b):
        y = jax.lax.conv_general_dilated(
            x, w, window_strides=(1,), padding=[(PAD, PAD)],
            dimension_numbers=("NCH", "OIH", "NCH"))
        return y + b[None, :, None]
    h = conv1d(jnp.maximum(x_ncl, 0.0), w1, b1)
    h = conv1d(jnp.maximum(h, 0.0), w2, b2)
    return x_ncl + 0.3 * h


if __name__ == "__main__":
    # ResBlock(input_nc=4, output_nc=4); residual add requires input_nc == output_nc.
    N, C, L = 2, 4, 16
    key = jax.random.PRNGKey(0)
    kx, kw1, kb1, kw2, kb2 = jax.random.split(key, 5)

    x = jax.random.normal(kx, (N, C, L), dtype=jnp.float32)
    w1 = 0.1 * jax.random.normal(kw1, (C, C, K), dtype=jnp.float32)   # (Cout, Cin, K)
    b1 = 0.1 * jax.random.normal(kb1, (C,), dtype=jnp.float32)
    w2 = 0.1 * jax.random.normal(kw2, (C, C, K), dtype=jnp.float32)
    b2 = 0.1 * jax.random.normal(kb2, (C,), dtype=jnp.float32)

    out = resblock_forward(x, w1, b1, w2, b2)
    jax.block_until_ready(out)

    ref = _reference_forward(x, w1, b1, w2, b2)
    assert out.shape == (N, C, L)
    assert jnp.allclose(out, ref, atol=1e-4, rtol=1e-4)

    print("KERNEL_OK")
</pallas_src>

<mosaic_0001>
module attributes {stable_mosaic.version = 11 : i64} {
  func.func @resblock_kernel(%arg0: i32, %arg1: memref<1x4x128xf32, #tpu.memory_space<vmem>>, %arg2: memref<4x52xf32, #tpu.memory_space<vmem>>, %arg3: memref<4x1xf32, #tpu.memory_space<vmem>>, %arg4: memref<4x52xf32, #tpu.memory_space<vmem>>, %arg5: memref<4x1xf32, #tpu.memory_space<vmem>>, %arg6: memref<1x4x16xf32, #tpu.memory_space<vmem>>) attributes {dimension_semantics = [#tpu.dimension_semantics<parallel>], iteration_bounds = array<i64: 2>, scalar_prefetch = 0 : i64, scratch_operands = 0 : i64, tpu.core_type = #tpu.core_type<tc>, window_params = [{transform_indices = @transform_0, window_bounds = array<i64: 1, 4, 128>}, {pipeline_mode = #tpu.pipeline_mode<synchronous>, transform_indices = @transform_1, window_bounds = array<i64: 4, 52>}, {pipeline_mode = #tpu.pipeline_mode<synchronous>, transform_indices = @transform_2, window_bounds = array<i64: 4, 1>}, {pipeline_mode = #tpu.pipeline_mode<synchronous>, transform_indices = @transform_3, window_bounds = array<i64: 4, 52>}, {pipeline_mode = #tpu.pipeline_mode<synchronous>, transform_indices = @transform_4, window_bounds = array<i64: 4, 1>}, {transform_indices = @transform_5, window_bounds = array<i64: 1, 4, 16>}]} {
    %c0 = arith.constant 0 : index
    %c0_0 = arith.constant 0 : index
    %c0_1 = arith.constant 0 : index
    %0 = vector.load %arg1[%c0, %c0_0, %c0_1] : memref<1x4x128xf32, #tpu.memory_space<vmem>>, vector<1x4x128xf32>
    %1 = vector.shape_cast %0 : vector<1x4x128xf32> to vector<4x128xf32>
    %cst = arith.constant 0.000000e+00 : f32
    %2 = vector.broadcast %cst : f32 to vector<4x128xf32>
    %3 = arith.maximumf %1, %2 : vector<4x128xf32>
    %c0_2 = arith.constant 0 : index
    %c0_3 = arith.constant 0 : index
    %4 = vector.load %arg2[%c0_2, %c0_3] : memref<4x52xf32, #tpu.memory_space<vmem>>, vector<4x52xf32>
    %c6_i32 = arith.constant 6 : i32
    %5 = tpu.dynamic_rotate %3 by %c6_i32 dim 1 : vector<4x128xf32>, i32 -> vector<4x128xf32>
    %c5_i32 = arith.constant 5 : i32
    %6 = tpu.dynamic_rotate %3 by %c5_i32 dim 1 : vector<4x128xf32>, i32 -> vector<4x128xf32>
    %c4_i32 = arith.constant 4 : i32
    %7 = tpu.dynamic_rotate %3 by %c4_i32 dim 1 : vector<4x128xf32>, i32 -> vector<4x128xf32>
    %c3_i32 = arith.constant 3 : i32
    %8 = tpu.dynamic_rotate %3 by %c3_i32 dim 1 : vector<4x128xf32>, i32 -> vector<4x128xf32>
    %c2_i32 = arith.constant 2 : i32
    %9 = tpu.dynamic_rotate %3 by %c2_i32 dim 1 : vector<4x128xf32>, i32 -> vector<4x128xf32>
    %c1_i32 = arith.constant 1 : i32
    %10 = tpu.dynamic_rotate %3 by %c1_i32 dim 1 : vector<4x128xf32>, i32 -> vector<4x128xf32>
    %c127_i32 = arith.constant 127 : i32
    %11 = tpu.dynamic_rotate %3 by %c127_i32 dim 1 : vector<4x128xf32>, i32 -> vector<4x128xf32>
    %c126_i32 = arith.constant 126 : i32
    %12 = tpu.dynamic_rotate %3 by %c126_i32 dim 1 : vector<4x128xf32>, i32 -> vector<4x128xf32>
    %c125_i32 = arith.constant 125 : i32
    %13 = tpu.dynamic_rotate %3 by %c125_i32 dim 1 : vector<4x128xf32>, i32 -> vector<4x128xf32>
    %c124_i32 = arith.constant 124 : i32
    %14 = tpu.dynamic_rotate %3 by %c124_i32 dim 1 : vector<4x128xf32>, i32 -> vector<4x128xf32>
    %c123_i32 = arith.constant 123 : i32
    %15 = tpu.dynamic_rotate %3 by %c123_i32 dim 1 : vector<4x128xf32>, i32 -> vector<4x128xf32>
    %c122_i32 = arith.constant 122 : i32
    %16 = tpu.dynamic_rotate %3 by %c122_i32 dim 1 : vector<4x128xf32>, i32 -> vector<4x128xf32>
    %17 = tpu.concatenate %5, %6, %7, %8, %9, %10, %3, %11, %12, %13, %14, %15, %16 in 0 : vector<4x128xf32>, vector<4x128xf32>, vector<4x128xf32>, vector<4x128xf32>, vector<4x128xf32>, vector<4x128xf32>, vector<4x128xf32>, vector<4x128xf32>, vector<4x128xf32>, vector<4x128xf32>, vector<4x128xf32>, vector<4x128xf32>, vector<4x128xf32> -> vector<52x128xf32>
    %cst_4 = arith.constant dense<0.000000e+00> : vector<4x128xf32>
    %18 = tpu.matmul %4, %17, %cst_4 {dimension_numbers = #tpu.dot_dimension_numbers<[1], [0], [0], [1], [0, 0, 1, 1], [], []>} : vector<4x52xf32>, vector<52x128xf32>, vector<4x128xf32> -> vector<4x128xf32>
    %c0_5 = arith.constant 0 : index
    %c0_6 = arith.constant 0 : index
    %19 = vector.load %arg3[%c0_5, %c0_6] : memref<4x1xf32, #tpu.memory_space<vmem>>, vector<4x1xf32>
    %20 = vector.broadcast %19 : vector<4x1xf32> to vector<4x128xf32>
    %21 = arith.addf %18, %20 : vector<4x128xf32>
    %cst_7 = arith.constant 0.000000e+00 : f32
    %22 = vector.broadcast %cst_7 : f32 to vector<4x128xf32>
    %23 = arith.maximumf %21, %22 : vector<4x128xf32>
    %24 = tpu.iota {dimensions = array<i32: 1>} : vector<4x128xi32>
    %c16_i32 = arith.constant 16 : i32
    %25 = vector.broadcast %c16_i32 : i32 to vector<4x128xi32>
    %26 = arith.cmpi slt, %24, %25 : vector<4x128xi32>
    %cst_8 = arith.constant 0.000000e+00 : f32
    %27 = vector.broadcast %cst_8 : f32 to vector<4x128xf32>
    %28 = arith.select %26, %23, %27 : vector<4x128xi1>, vector<4x128xf32>
    %c0_9 = arith.constant 0 : index
    %c0_10 = arith.constant 0 : index
    %29 = vector.load %arg4[%c0_9, %c0_10] : memref<4x52xf32, #tpu.memory_space<vmem>>, vector<4x52xf32>
    %c6_i32_11 = arith.constant 6 : i32
    %30 = tpu.dynamic_rotate %28 by %c6_i32_11 dim 1 : vector<4x128xf32>, i32 -> vector<4x128xf32>
    %c5_i32_12 = arith.constant 5 : i32
    %31 = tpu.dynamic_rotate %28 by %c5_i32_12 dim 1 : vector<4x128xf32>, i32 -> vector<4x128xf32>
    %c4_i32_13 = arith.constant 4 : i32
    %32 = tpu.dynamic_rotate %28 by %c4_i32_13 dim 1 : vector<4x128xf32>, i32 -> vector<4x128xf32>
    %c3_i32_14 = arith.constant 3 : i32
    %33 = tpu.dynamic_rotate %28 by %c3_i32_14 dim 1 : vector<4x128xf32>, i32 -> vector<4x128xf32>
    %c2_i32_15 = arith.constant 2 : i32
    %34 = tpu.dynamic_rotate %28 by %c2_i32_15 dim 1 : vector<4x128xf32>, i32 -> vector<4x128xf32>
    %c1_i32_16 = arith.constant 1 : i32
    %35 = tpu.dynamic_rotate %28 by %c1_i32_16 dim 1 : vector<4x128xf32>, i32 -> vector<4x128xf32>
    %c127_i32_17 = arith.constant 127 : i32
    %36 = tpu.dynamic_rotate %28 by %c127_i32_17 dim 1 : vector<4x128xf32>, i32 -> vector<4x128xf32>
    %c126_i32_18 = arith.constant 126 : i32
    %37 = tpu.dynamic_rotate %28 by %c126_i32_18 dim 1 : vector<4x128xf32>, i32 -> vector<4x128xf32>
    %c125_i32_19 = arith.constant 125 : i32
    %38 = tpu.dynamic_rotate %28 by %c125_i32_19 dim 1 : vector<4x128xf32>, i32 -> vector<4x128xf32>
    %c124_i32_20 = arith.constant 124 : i32
    %39 = tpu.dynamic_rotate %28 by %c124_i32_20 dim 1 : vector<4x128xf32>, i32 -> vector<4x128xf32>
    %c123_i32_21 = arith.constant 123 : i32
    %40 = tpu.dynamic_rotate %28 by %c123_i32_21 dim 1 : vector<4x128xf32>, i32 -> vector<4x128xf32>
    %c122_i32_22 = arith.constant 122 : i32
    %41 = tpu.dynamic_rotate %28 by %c122_i32_22 dim 1 : vector<4x128xf32>, i32 -> vector<4x128xf32>
    %42 = tpu.concatenate %30, %31, %32, %33, %34, %35, %28, %36, %37, %38, %39, %40, %41 in 0 : vector<4x128xf32>, vector<4x128xf32>, vector<4x128xf32>, vector<4x128xf32>, vector<4x128xf32>, vector<4x128xf32>, vector<4x128xf32>, vector<4x128xf32>, vector<4x128xf32>, vector<4x128xf32>, vector<4x128xf32>, vector<4x128xf32>, vector<4x128xf32> -> vector<52x128xf32>
    %cst_23 = arith.constant dense<0.000000e+00> : vector<4x128xf32>
    %43 = tpu.matmul %29, %42, %cst_23 {dimension_numbers = #tpu.dot_dimension_numbers<[1], [0], [0], [1], [0, 0, 1, 1], [], []>} : vector<4x52xf32>, vector<52x128xf32>, vector<4x128xf32> -> vector<4x128xf32>
    %c0_24 = arith.constant 0 : index
    %c0_25 = arith.constant 0 : index
    %44 = vector.load %arg5[%c0_24, %c0_25] : memref<4x1xf32, #tpu.memory_space<vmem>>, vector<4x1xf32>
    %45 = vector.broadcast %44 : vector<4x1xf32> to vector<4x128xf32>
    %46 = arith.addf %43, %45 : vector<4x128xf32>
    %47 = vector.extract_strided_slice %1 {offsets = [0, 0], sizes = [4, 16], strides = [1, 1]} : vector<4x128xf32> to vector<4x16xf32>
    %48 = vector.extract_strided_slice %46 {offsets = [0, 0], sizes = [4, 16], strides = [1, 1]} : vector<4x128xf32> to vector<4x16xf32>
    %49 = arith.addf %47, %48 : vector<4x16xf32>
    %c0_26 = arith.constant 0 : index
    %c0_27 = arith.constant 0 : index
    %c0_28 = arith.constant 0 : index
    %50 = vector.load %arg6[%c0_26, %c0_27, %c0_28] : memref<1x4x16xf32, #tpu.memory_space<vmem>>, vector<1x4x16xf32>
    %51 = vector.shape_cast %50 : vector<1x4x16xf32> to vector<4x16xf32>
    %52 = vector.shape_cast %49 : vector<4x16xf32> to vector<1x4x16xf32>
    tpu.vector_store %arg6[%c0_26, %c0_27, %c0_28], %52 {strides = array<i32>} : memref<1x4x16xf32, #tpu.memory_space<vmem>>, vector<1x4x16xf32>,
    return
  }
  func.func @transform_0(%arg0: i32) -> (i32, i32, i32) {
    %c0_i32 = arith.constant 0 : i32
    %c0_i32_0 = arith.constant 0 : i32
    %c0_i32_1 = arith.constant 0 : i32
    return %arg0, %c0_i32, %c0_i32_0 : i32, i32, i32
  }
  func.func @transform_1(%arg0: i32) -> (i32, i32) {
    %c0_i32 = arith.constant 0 : i32
    %c0_i32_0 = arith.constant 0 : i32
    %c0_i32_1 = arith.constant 0 : i32
    return %c0_i32, %c0_i32_0 : i32, i32
  }
  func.func @transform_2(%arg0: i32) -> (i32, i32) {
    %c0_i32 = arith.constant 0 : i32
    %c0_i32_0 = arith.constant 0 : i32
    %c0_i32_1 = arith.constant 0 : i32
    return %c0_i32, %c0_i32_0 : i32, i32
  }
  func.func @transform_3(%arg0: i32) -> (i32, i32) {
    %c0_i32 = arith.constant 0 : i32
    %c0_i32_0 = arith.constant 0 : i32
    %c0_i32_1 = arith.constant 0 : i32
    return %c0_i32, %c0_i32_0 : i32, i32
  }
  func.func @transform_4(%arg0: i32) -> (i32, i32) {
    %c0_i32 = arith.constant 0 : i32
    %c0_i32_0 = arith.constant 0 : i32
    %c0_i32_1 = arith.constant 0 : i32
    return %c0_i32, %c0_i32_0 : i32, i32
  }
  func.func @transform_5(%arg0: i32) -> (i32, i32, i32) {
    %c0_i32 = arith.constant 0 : i32
    %c0_i32_0 = arith.constant 0 : i32
    %c0_i32_1 = arith.constant 0 : i32
    return %arg0, %c0_i32, %c0_i32_0 : i32, i32, i32
  }
}

</mosaic_0001>

<llo_original>
// kernel: tpu_custom_call.1
$region0: #{tpu_custom_call.1}
  #allocation0 [shape = 'u32[]', space=smem, size = 0x4, offset = 0x4, fixed_abs, tag = 'smem constant byte address 0x4 - core index']
  #allocation1 [shape = 'u32[144,128]{1,0:T(1,128)}', space=vmem, size = 0x12000, scoped, tag = 'internal scratch']
  %s0 = inlined_call_operand.vmem [shape: f32[2,4,128], index: 0, kind: input, shape index: {}]
  %s1 = inlined_call_operand.vmem [shape: f32[4,52], index: 1, kind: input, shape index: {}]
  %s2 = inlined_call_operand.vmem [shape: f32[4,1], index: 2, kind: input, shape index: {}]
  %s3 = inlined_call_operand.vmem [shape: f32[4,52], index: 3, kind: input, shape index: {}]
  %s4 = inlined_call_operand.vmem [shape: f32[4,1], index: 4, kind: input, shape index: {}]
  %s5 = inlined_call_operand.hbm [shape: f32[2,4,16], index: 5, kind: output, shape index: {}]
  %s6 = sld [smem:[#allocation0]]
  $region53: #{tpu_custom_call.1} parent=0
    _
  %s8 = ssub.s32 1, %s6
  %s9 = scalar_select 0, %s8, %s6
  $region1: #{tpu_custom_call.1} parent=0
    #allocation2 [shape = 'u8[4096]{0}', space=vmem, size = 0x1000, scoped, tag = 'output window, operand 0']
    #allocation3 [shape = 's32[2]{0}', space=sflag, size = 0x8, scoped, tag = 'scoped memory for tpu_custom_call.1']
    %10 = vsyncpa [#allocation3], 0
    %s11 = scalar_lea.sflag [#allocation3], 1
    %12 = vsyncpa %s11, 0
    loop: start=0, step=1, limit=4
    $region2: #{tpu_custom_call.1} parent=1 // loop_pre_header
      _
    $region3: #{tpu_custom_call.1} parent=1 // loop_header
      %s14 = sphi 0, %s18
      %p15 = scmp.ge.s32.totalorder %s14, 4
      %s24 = sphi 0, %s26
      %s27 = sphi 0, %s24
      %s28 = sphi 0, %s27
      %s44 = sphi 0, %s28
      %s48 = sphi 0, %s48
      %s50 = sphi 0, %s48
      %s51 = sphi 0, %s50
      %s65 = sphi 0, %s51
      %s69 = sphi 0, %s69
      %s71 = sphi 0, %s69
      %s72 = sphi 0, %s71
      %s86 = sphi 0, %s72
      %s90 = sphi 0, %s90
      %s92 = sphi 0, %s90
      %s93 = sphi 0, %s92
      %s107 = sphi 0, %s93
      %s111 = sphi 0, %s111
      %s113 = sphi 0, %s111
      %s114 = sphi 0, %s113
      %s128 = sphi 0, %s114
      %s134 = sphi 0, %s136
      %s137 = sphi 0, %s134
      %s138 = sphi 0, %s137
      %s154 = sphi 0, %s138
    $region4: #{tpu_custom_call.1} parent=1 // loop_header_branch
      %17 = sbr.rel (%p15) target = $region8
    $region5: #{tpu_custom_call.1} parent=1 // loop_body
      %s19 = ssub.s32 %s14, 1
      %s20 = ssub.s32 %s14, 2
      %s21 = sadd.s32 %s14, 1
      %s22 = ssub.s32 %s14, %s21
      %p23 = scmp.eq.s32.totalorder %s22, 0
      %s25 = sadd.s32 %s24, 1
      %s26 = scalar_select %p23, %s24, %s25
      %p29 = pneg %p23
      %p30 = scmp.eq.s32.totalorder %s14, 1
      %p31 = por %p29, %p30
      %p32 = scmp.ne.s32.totalorder %s24, %s27
      %p33 = scmp.eq.s32.totalorder %s14, 0
      %p34 = por %p32, %p33
      %p35 = scmp.ne.s32.totalorder %s24, %s27
      %p36 = scmp.eq.s32.totalorder %s19, 1
      %p37 = por %p35, %p36
      %p38 = scmp.ne.s32.totalorder %s27, %s28
      %p39 = scmp.eq.s32.totalorder %s19, 0
      %p40 = por %p38, %p39
      %p41 = scmp.ne.s32.totalorder %s27, %s28
      %p42 = scmp.eq.s32.totalorder %s20, 1
      %p43 = por %p41, %p42
      %p45 = scmp.ne.s32.totalorder %s28, %s44
      %p46 = scmp.eq.s32.totalorder %s20, 0
      %p47 = por %p45, %p46
      %s49 = sadd.s32 %s48, 1
      %p52 = scmp.eq.s32.totalorder %s14, 1
      %p53 = scmp.ne.s32.totalorder %s48, %s50
      %p54 = scmp.eq.s32.totalorder %s14, 0
      %p55 = por %p53, %p54
      %p56 = scmp.ne.s32.totalorder %s48, %s50
      %p57 = scmp.eq.s32.totalorder %s19, 1
      %p58 = por %p56, %p57
      %p59 = scmp.ne.s32.totalorder %s50, %s51
      %p60 = scmp.eq.s32.totalorder %s19, 0
      %p61 = por %p59, %p60
      %p62 = scmp.ne.s32.totalorder %s50, %s51
      %p63 = scmp.eq.s32.totalorder %s20, 1
      %p64 = por %p62, %p63
      %p66 = scmp.ne.s32.totalorder %s51, %s65
      %p67 = scmp.eq.s32.totalorder %s20, 0
      %p68 = por %p66, %p67
      %s70 = sadd.s32 %s69, 1
      %p73 = scmp.eq.s32.totalorder %s14, 1
      %p74 = scmp.ne.s32.totalorder %s69, %s71
      %p75 = scmp.eq.s32.totalorder %s14, 0
      %p76 = por %p74, %p75
      %p77 = scmp.ne.s32.totalorder %s69, %s71
      %p78 = scmp.eq.s32.totalorder %s19, 1
      %p79 = por %p77, %p78
      %p80 = scmp.ne.s32.totalorder %s71, %s72
      %p81 = scmp.eq.s32.totalorder %s19, 0
      %p82 = por %p80, %p81
      %p83 = scmp.ne.s32.totalorder %s71, %s72
      %p84 = scmp.eq.s32.totalorder %s20, 1
      %p85 = por %p83, %p84
      %p87 = scmp.ne.s32.totalorder %s72, %s86
      %p88 = scmp.eq.s32.totalorder %s20, 0
      %p89 = por %p87, %p88
      %s91 = sadd.s32 %s90, 1
      %p94 = scmp.eq.s32.totalorder %s14, 1
      %p95 = scmp.ne.s32.totalorder %s90, %s92
      %p96 = scmp.eq.s32.totalorder %s14, 0
      %p97 = por %p95, %p96
      %p98 = scmp.ne.s32.totalorder %s90, %s92
      %p99 = scmp.eq.s32.totalorder %s19, 1
      %p100 = por %p98, %p99
      %p101 = scmp.ne.s32.totalorder %s92, %s93
      %p102 = scmp.eq.s32.totalorder %s19, 0
      %p103 = por %p101, %p102
      %p104 = scmp.ne.s32.totalorder %s92, %s93
      %p105 = scmp.eq.s32.totalorder %s20, 1
      %p106 = por %p104, %p105
      %p108 = scmp.ne.s32.totalorder %s93, %s107
      %p109 = scmp.eq.s32.totalorder %s20, 0
      %p110 = por %p108, %p109
      %s112 = sadd.s32 %s111, 1
      %p115 = scmp.eq.s32.totalorder %s14, 1
      %p116 = scmp.ne.s32.totalorder %s111, %s113
      %p117 = scmp.eq.s32.totalorder %s14, 0
      %p118 = por %p116, %p117
      %p119 = scmp.ne.s32.totalorder %s111, %s113
      %p120 = scmp.eq.s32.totalorder %s19, 1
      %p121 = por %p119, %p120
      %p122 = scmp.ne.s32.totalorder %s113, %s114
      %p123 = scmp.eq.s32.totalorder %s19, 0
      %p124 = por %p122, %p123
      %p125 = scmp.ne.s32.totalorder %s113, %s114
      %p126 = scmp.eq.s32.totalorder %s20, 1
      %p127 = por %p125, %p126
      %p129 = scmp.ne.s32.totalorder %s114, %s128
      %p130 = scmp.eq.s32.totalorder %s20, 0
      %p131 = por %p129, %p130
      %s132 = ssub.s32 %s14, %s21
      %p133 = scmp.eq.s32.totalorder %s132, 0
      %s135 = sadd.s32 %s134, 1
      %s136 = scalar_select %p133, %s134, %s135
      %p139 = pneg %p133
      %p140 = scmp.eq.s32.totalorder %s14, 1
      %p141 = por %p139, %p140
      %p142 = scmp.ne.s32.totalorder %s134, %s137
      %p143 = scmp.eq.s32.totalorder %s14, 0
      %p144 = por %p142, %p143
      %p145 = scmp.ne.s32.totalorder %s134, %s137
      %p146 = scmp.eq.s32.totalorder %s19, 1
      %p147 = por %p145, %p146
      %p148 = scmp.ne.s32.totalorder %s137, %s138
      %p149 = scmp.eq.s32.totalorder %s19, 0
      %p150 = por %p148, %p149
      %p151 = scmp.ne.s32.totalorder %s137, %s138
      %p152 = scmp.eq.s32.totalorder %s20, 1
      %p153 = por %p151, %p152
      %p155 = scmp.ne.s32.totalorder %s138, %s154
      %p156 = scmp.eq.s32.totalorder %s20, 0
      %p157 = por %p155, %p156
      %p158 = scmp.le.s32.totalorder 1, %s14
      %p159 = scmp.lt.s32.totalorder %s14, 3
      %p160 = pnand %p158, %p159
      %p161 = pneg %p160
      // Predicated region
      $region9: #{tpu_custom_call.1} parent=5 // pred_check
        _
      $region10: #{tpu_custom_call.1} parent=5 // pred_check_branch
        %163 = sbr.rel (%p160) target = $region12
      $region11: #{tpu_custom_call.1} parent=5 // pred_region
        %s164 = ssub.s32 %s14, 1
        // Predicated region
        $region13: #{tpu_custom_call.1} parent=11 // pred_check
          %p165 = pneg %p61
        $region14: #{tpu_custom_call.1} parent=11 // pred_check_branch
          %167 = sbr.rel (%p165) target = $region16
        $region15: #{tpu_custom_call.1} parent=11 // pred_region
          _
        $region16: #{tpu_custom_call.1} parent=11 // pred_fallthru
          _
        // Predicated region
        $region17: #{tpu_custom_call.1} parent=11 // pred_check
          %p168 = pneg %p82
        $region18: #{tpu_custom_call.1} parent=11 // pred_check_branch
          %170 = sbr.rel (%p168) target = $region20
        $region19: #{tpu_custom_call.1} parent=11 // pred_region
          _
        $region20: #{tpu_custom_call.1} parent=11 // pred_fallthru
          _
        // Predicated region
        $region21: #{tpu_custom_call.1} parent=11 // pred_check
          %p171 = pneg %p103
        $region22: #{tpu_custom_call.1} parent=11 // pred_check_branch
          %173 = sbr.rel (%p171) target = $region24
        $region23: #{tpu_custom_call.1} parent=11 // pred_region
          _
        $region24: #{tpu_custom_call.1} parent=11 // pred_fallthru
          _
        // Predicated region
        $region25: #{tpu_custom_call.1} parent=11 // pred_check
          %p174 = pneg %p124
        $region26: #{tpu_custom_call.1} parent=11 // pred_check_branch
          %176 = sbr.rel (%p174) target = $region28
        $region27: #{tpu_custom_call.1} parent=11 // pred_region
          _
        $region28: #{tpu_custom_call.1} parent=11 // pred_fallthru
          _
      $region12: #{tpu_custom_call.1} parent=5 // pred_fallthru
        _
      %p177 = scmp.lt.s32.totalorder %s14, 2
      // Predicated region
      $region29: #{tpu_custom_call.1} parent=5 // pred_check
        %p178 = pneg %p177
      $region30: #{tpu_custom_call.1} parent=5 // pred_check_branch
        %180 = sbr.rel (%p178) target = $region32
      $region31: #{tpu_custom_call.1} parent=5 // pred_region
        // Predicated region
        $region33: #{tpu_custom_call.1} parent=31 // pred_check
          %p181 = pneg %p34
        $region34: #{tpu_custom_call.1} parent=31 // pred_check_branch
          %183 = sbr.rel (%p181) target = $region36
        $region35: #{tpu_custom_call.1} parent=31 // pred_region
          %p184 = scmp.lt.s32.totalorder %s14, 1
          %s185 = scalar_select %p184, %s14, 1
          %s186 = smul.addr %s185, 4
          %s187 = scalar_lea.vmem %s0, %s186
        $region36: #{tpu_custom_call.1} parent=31 // pred_fallthru
          _
      $region32: #{tpu_custom_call.1} parent=5 // pred_fallthru
        _
      %p188 = scmp.le.s32.totalorder 1, %s14
      %p189 = scmp.lt.s32.totalorder %s14, 3
      %p190 = pnand %p188, %p189
      %p191 = pneg %p190
      // Predicated region
      $region37: #{tpu_custom_call.1} parent=5 // pred_check
        _
      $region38: #{tpu_custom_call.1} parent=5 // pred_check_branch
        %193 = sbr.rel (%p190) target = $region40
      $region39: #{tpu_custom_call.1} parent=5 // pred_region
        %s194 = ssub.s32 %s14, 1
        %p195 = scmp.lt.s32.totalorder %s19, 1
        %s196 = scalar_select %p195, %s19, 1
        %s197 = smul.addr %s196, 4
        %s198 = scalar_lea.vmem %s0, %s197
        %p199 = pneg %p40
        %p200 = pneg %p37
        %p201 = pneg %p61
        %p202 = pneg %p58
        %p203 = pneg %p82
        %p204 = pneg %p79
        %p205 = pneg %p103
        %p206 = pneg %p100
        %p207 = pneg %p124
        %p208 = pneg %p121
        %p209 = pneg %p150
        %p210 = pneg %p147
        %s211 = sand.u32 %s137, 1
        %s212 = scalar_lea.sflag [#allocation3], %s211
        %s213 = sand.u32 %s137, 1
        %s214 = smul.addr %s213, 4
        %s215 = scalar_lea.vmem [#allocation2], %s214
        %p216 = scmp.lt.s32.totalorder %s19, 1
        %s217 = scalar_select %p216, %s19, 1
        %s218 = smul.addr %s217, 4
        %s219 = scalar_lea.vmem %s0, %s218
        %v220 = vld [vmem:[%s219] sm:$0xf]
        %v221 = vmax.f32 %v220, 0.0
        %v222 = vld [vmem:[%s1] sm:$0xf]
        %223 = vrot.lane.b32.xlu0 %v221, 6
        %v224 = vpop.permute.xlu0 %223
        %225 = vrot.lane.b32.xlu0 %v221, 5
        %v226 = vpop.permute.xlu0 %225
        %227 = vrot.lane.b32.xlu0 %v221, 4
        %v228 = vpop.permute.xlu0 %227
        %229 = vrot.lane.b32.xlu0 %v221, 3
        %v230 = vpop.permute.xlu0 %229
        %231 = vrot.lane.b32.xlu0 %v221, 2
        %v232 = vpop.permute.xlu0 %231
        %233 = vrot.lane.b32.xlu0 %v221, 1
        %v234 = vpop.permute.xlu0 %233
        %235 = vrot.lane.b32.xlu0 %v221, 127
        %v236 = vpop.permute.xlu0 %235
        %237 = vrot.lane.b32.xlu0 %v221, 126
        %v238 = vpop.permute.xlu0 %237
        %239 = vrot.lane.b32.xlu0 %v221, 125
        %v240 = vpop.permute.xlu0 %239
        %241 = vrot.lane.b32.xlu0 %v221, 124
        %v242 = vpop.permute.xlu0 %241
        %243 = vrot.lane.b32.xlu0 %v221, 123
        %v244 = vpop.permute.xlu0 %243
        %245 = vrot.lane.b32.xlu0 %v221, 122
        %v246 = vpop.permute.xlu0 %245
        %v248 = vrot.slane %v226, 4
        %v251 = vrot.slane %v230, 4
        %v254 = vrot.slane %v234, 4
        %v257 = vrot.slane %v236, 4
        %v260 = vrot.slane %v240, 4
        %v263 = vrot.slane %v244, 4
        %vm265 = vcmask 1043456
        %v266 = vsel %vm265, %v224, %v248
        %v267 = vsel %vm265, %v228, %v251
        %v268 = vsel %vm265, %v232, %v254
        %v269 = vsel %vm265, %v221, %v257
        %v270 = vsel %vm265, %v238, %v260
        %v271 = vsel %vm265, %v242, %v263
        %v272 = vld [vmem:[%s2] sm:$0xf]
        %274 = vset.pattern.permute.xlu0 0
        %275 = vperm.xlu0 %274, %v272
        %v276 = vpop.permute.xlu0 %275
        %vm278 = vcmask 424960
        %v280 = vsel %vm278, %v222, 0
        %v283 = vsel %vm265, %v246, 0
        %285 = vmatprep.subr.mxu0 0.0
        %286 = vmatpush1.msra.mxu0 %v266
        %287 = vmatprep.subr.mxu0 0.0
        %288 = vmatpush1.msra.mxu0 %v267
        %289 = vmatprep.subr.mxu0 0.0
        %290 = vmatpush1.msra.mxu0 %v268
        %291 = vmatprep.subr.mxu0 0.0
        %292 = vmatpush1.msra.mxu0 %v269
        %293 = vmatprep.subr.mxu0 0.0
        %294 = vmatpush1.msra.mxu0 %v270
        %295 = vmatprep.subr.mxu0 0.0
        %296 = vmatpush1.msra.mxu0 %v271
        %297 = vmatprep.subr.mxu0 0.0
        %298 = vmatpush1.msra.mxu0 %v283
        %299 = vmatprep.subr.mxu0 0.0
        %300 = vmatpush1.msra.mxu0 0.0
        %301 = vmatprep.subr.mxu0 0.0
        %302 = vmatpush1.msra.mxu0 0.0
        %303 = vmatprep.subr.mxu0 0.0
        %304 = vmatpush1.msra.mxu0 0.0
        %305 = vmatprep.subr.mxu0 0.0
        %306 = vmatpush1.msra.mxu0 0.0
        %307 = vmatprep.subr.mxu0 0.0
        %308 = vmatpush1.msra.mxu0 0.0
        %309 = vmatprep.subr.mxu0 0.0
        %310 = vmatpush1.msra.mxu0 0.0
        %311 = vmatprep.subr.mxu0 0.0
        %312 = vmatpush1.msra.mxu0 0.0
        %313 = vmatprep.subr.mxu0 0.0
        %314 = vmatpush1.msra.mxu0 0.0
        %315 = vmatprep.subr.mxu0 0.0
        %316 = vmatpush1.msra.mxu0 0.0
        %317 = vmatprep.subr.mxu0 0.0
        %318 = vmatpush1.msra.mxu0 0.0
        %319 = vmatprep.subr.mxu0 0.0
        %320 = vmatpush1.msra.mxu0 0.0
        %321 = vmatprep.subr.mxu0 0.0
        %322 = vmatpush1.msra.mxu0 0.0
        %323 = vmatprep.subr.mxu0 0.0
        %324 = vmatpush1.msra.mxu0 0.0
        %325 = vmatprep.subr.mxu0 0.0
        %326 = vmatpush1.msra.mxu0 0.0
        %327 = vmatprep.subr.mxu0 0.0
        %328 = vmatpush1.msra.mxu0 0.0
        %329 = vmatprep.subr.mxu0 0.0
        %330 = vmatpush1.msra.mxu0 0.0
        %331 = vmatprep.subr.mxu0 0.0
        %332 = vmatpush1.msra.mxu0 0.0
        %333 = vmatprep.subr.mxu0 0.0
        %334 = vmatpush1.msra.mxu0 0.0
        %335 = vmatprep.subr.mxu0 0.0
        %336 = vmatpush1.msra.mxu0 0.0
        %337 = vmatprep.subr.mxu0 0.0
        %338 = vmatpush1.msra.mxu0 0.0
        %339 = vmatprep.subr.mxu0 0.0
        %340 = vmatpush1.msra.mxu0 0.0
        %341 = vmatprep.subr.mxu0 0.0
        %342 = vmatpush1.msra.mxu0 0.0
        %343 = vmatprep.subr.mxu0 0.0
        %344 = vmatpush1.msra.mxu0 0.0
        %345 = vmatprep.subr.mxu0 0.0
        %346 = vmatpush1.msra.mxu0 0.0
        %347 = vmatprep.subr.mxu0 0.0
        %348 = vmatpush1.msra.mxu0 0.0
        %349 = vmatprep.mubr.f32.mxu0 0.0
        %350 = vmatmul.mubr.f32.gmra.mrb[0].mxu0 %v280
        %v351 = vpop.f32.mrb[0].mxu0
        %v352 = vadd.f32 %v276, %v351
        %v353 = vpop.f32.mrb[0].mxu0
        %354 = vdwg.mxu0
        %v355 = vmax.f32 %v352, 0.0
        %v356 = vlaneseq
        %v357 = vand.u32 %v356, 127
        %vm358 = vcmp.lt.s32.totalorder %v357, 16
        %v359 = vsel %vm358, %v355, 0.0
        %v360 = vld [vmem:[%s3] sm:$0xf]
        %361 = vrot.lane.b32.xlu0 %v359, 6
        %v362 = vpop.permute.xlu0 %361
        %363 = vrot.lane.b32.xlu0 %v359, 5
        %v364 = vpop.permute.xlu0 %363
        %365 = vrot.lane.b32.xlu0 %v359, 4
        %v366 = vpop.permute.xlu0 %365
        %367 = vrot.lane.b32.xlu0 %v359, 3
        %v368 = vpop.permute.xlu0 %367
        %369 = vrot.lane.b32.xlu0 %v359, 2
        %v370 = vpop.permute.xlu0 %369
        %371 = vrot.lane.b32.xlu0 %v359, 1
        %v372 = vpop.permute.xlu0 %371
        %373 = vrot.lane.b32.xlu0 %v359, 127
        %v374 = vpop.permute.xlu0 %373
        %375 = vrot.lane.b32.xlu0 %v359, 126
        %v376 = vpop.permute.xlu0 %375
        %377 = vrot.lane.b32.xlu0 %v359, 125
        %v378 = vpop.permute.xlu0 %377
        %379 = vrot.lane.b32.xlu0 %v359, 124
        %v380 = vpop.permute.xlu0 %379
        %381 = vrot.lane.b32.xlu0 %v359, 123
        %v382 = vpop.permute.xlu0 %381
        %383 = vrot.lane.b32.xlu0 %v359, 122
        %v384 = vpop.permute.xlu0 %383
        %v386 = vrot.slane %v364, 4
        %v389 = vrot.slane %v368, 4
        %v392 = vrot.slane %v372, 4
        %v395 = vrot.slane %v374, 4
        %v398 = vrot.slane %v378, 4
        %v401 = vrot.slane %v382, 4
        %v403 = vsel %vm265, %v362, %v386
        %v404 = vsel %vm265, %v366, %v389
        %v405 = vsel %vm265, %v370, %v392
        %v406 = vsel %vm265, %v359, %v395
        %v407 = vsel %vm265, %v376, %v398
        %v408 = vsel %vm265, %v380, %v401
        %v409 = vld [vmem:[%s4] sm:$0xf]
        %411 = vset.pattern.permute.xlu0 0
        %412 = vperm.xlu0 %411, %v409
        %v413 = vpop.permute.xlu0 %412
        %v416 = vsel %vm278, %v360, 0
        %v419 = vsel %vm265, %v384, 0
        %421 = vmatprep.subr.mxu0 0.0
        %422 = vmatpush1.msra.mxu0 %v403
        %423 = vmatprep.subr.mxu0 0.0
        %424 = vmatpush1.msra.mxu0 %v404
        %425 = vmatprep.subr.mxu0 0.0
        %426 = vmatpush1.msra.mxu0 %v405
        %427 = vmatprep.subr.mxu0 0.0
        %428 = vmatpush1.msra.mxu0 %v406
        %429 = vmatprep.subr.mxu0 0.0
        %430 = vmatpush1.msra.mxu0 %v407
        %431 = vmatprep.subr.mxu0 0.0
        %432 = vmatpush1.msra.mxu0 %v408
        %433 = vmatprep.subr.mxu0 0.0
        %434 = vmatpush1.msra.mxu0 %v419
        %435 = vmatprep.subr.mxu0 0.0
        %436 = vmatpush1.msra.mxu0 0.0
        %437 = vmatprep.subr.mxu0 0.0
        %438 = vmatpush1.msra.mxu0 0.0
        %439 = vmatprep.subr.mxu0 0.0
        %440 = vmatpush1.msra.mxu0 0.0
        %441 = vmatprep.subr.mxu0 0.0
        %442 = vmatpush1.msra.mxu0 0.0
        %443 = vmatprep.subr.mxu0 0.0
        %444 = vmatpush1.msra.mxu0 0.0
        %445 = vmatprep.subr.mxu0 0.0
        %446 = vmatpush1.msra.mxu0 0.0
        %447 = vmatprep.subr.mxu0 0.0
        %448 = vmatpush1.msra.mxu0 0.0
        %449 = vmatprep.subr.mxu0 0.0
        %450 = vmatpush1.msra.mxu0 0.0
        %451 = vmatprep.subr.mxu0 0.0
        %452 = vmatpush1.msra.mxu0 0.0
        %453 = vmatprep.subr.mxu0 0.0
        %454 = vmatpush1.msra.mxu0 0.0
        %455 = vmatprep.subr.mxu0 0.0
        %456 = vmatpush1.msra.mxu0 0.0
        %457 = vmatprep.subr.mxu0 0.0
        %458 = vmatpush1.msra.mxu0 0.0
        %459 = vmatprep.subr.mxu0 0.0
        %460 = vmatpush1.msra.mxu0 0.0
        %461 = vmatprep.subr.mxu0 0.0
        %462 = vmatpush1.msra.mxu0 0.0
        %463 = vmatprep.subr.mxu0 0.0
        %464 = vmatpush1.msra.mxu0 0.0
        %465 = vmatprep.subr.mxu0 0.0
        %466 = vmatpush1.msra.mxu0 0.0
        %467 = vmatprep.subr.mxu0 0.0
        %468 = vmatpush1.msra.mxu0 0.0
        %469 = vmatprep.subr.mxu0 0.0
        %470 = vmatpush1.msra.mxu0 0.0
        %471 = vmatprep.subr.mxu0 0.0
        %472 = vmatpush1.msra.mxu0 0.0
        %473 = vmatprep.subr.mxu0 0.0
        %474 = vmatpush1.msra.mxu0 0.0
        %475 = vmatprep.subr.mxu0 0.0
        %476 = vmatpush1.msra.mxu0 0.0
        %477 = vmatprep.subr.mxu0 0.0
        %478 = vmatpush1.msra.mxu0 0.0
        %479 = vmatprep.subr.mxu0 0.0
        %480 = vmatpush1.msra.mxu0 0.0
        %481 = vmatprep.subr.mxu0 0.0
        %482 = vmatpush1.msra.mxu0 0.0
        %483 = vmatprep.subr.mxu0 0.0
        %484 = vmatpush1.msra.mxu0 0.0
        %485 = vmatprep.mubr.f32.mxu0 0.0
        %486 = vmatmul.mubr.f32.gmra.mrb[0].mxu0 %v416
        %v487 = vpop.f32.mrb[0].mxu0
        %v488 = vadd.f32 %v413, %v487
        %v489 = vpop.f32.mrb[0].mxu0
        %490 = vdwg.mxu0
        %v491 = vadd.f32 %v220, %v488
        %vm492 = vcmask 125952
        %493 = vst.msk [vmem:[%s215] sm:$0xf] %vm492, %v491
        %s494 = sand.u32 %s137, 1
        %s495 = scalar_lea.sflag [#allocation3], %s494
        %s496 = sand.u32 %s137, 1
        %s497 = smul.addr %s496, 4
        %s498 = scalar_lea.vmem [#allocation2], %s497
        // Predicated region
        $region41: #{tpu_custom_call.1} parent=39 // pred_check
          %p499 = pneg %p147
        $region42: #{tpu_custom_call.1} parent=39 // pred_check_branch
          %501 = sbr.rel (%p499) target = $region44
        $region43: #{tpu_custom_call.1} parent=39 // pred_region
          %s503 = ssub.s32 64, 64
          %504 = vsyncadd %s495, %s503
          %s505 = smul.addr %s19, 64
          %s506 = scalar_lea.hbm %s5, %s505
          %s508 = sshll.u32 %s498, 4
          %s509 = int_to_ptr.vmem [resolvable:$true] %s508
          %511 = dma.vmem_to_hbm [thread:$0]  %s509, 64, %s506, %s495
        $region44: #{tpu_custom_call.1} parent=39 // pred_fallthru
          _
      $region40: #{tpu_custom_call.1} parent=5 // pred_fallthru
        _
      %p512 = scmp.le.s32.totalorder 2, %s14
      // Predicated region
      $region45: #{tpu_custom_call.1} parent=5 // pred_check
        %p513 = pneg %p512
      $region46: #{tpu_custom_call.1} parent=5 // pred_check_branch
        %515 = sbr.rel (%p513) target = $region48
      $region47: #{tpu_custom_call.1} parent=5 // pred_region
        %s516 = ssub.s32 %s14, 2
        // Predicated region
        $region49: #{tpu_custom_call.1} parent=47 // pred_check
          %p517 = pneg %p153
        $region50: #{tpu_custom_call.1} parent=47 // pred_check_branch
          %519 = sbr.rel (%p517) target = $region52
        $region51: #{tpu_custom_call.1} parent=47 // pred_region
          %s520 = sand.u32 %s138, 1
          %s521 = scalar_lea.sflag [#allocation3], %s520
          %s522 = sand.u32 %s138, 1
          %s523 = smul.addr %s522, 4
          %s524 = scalar_lea.vmem [#allocation2], %s523
          %525 = dma.done %s521, 64
        $region52: #{tpu_custom_call.1} parent=47 // pred_fallthru
          _
      $region48: #{tpu_custom_call.1} parent=5 // pred_fallthru
        _
    $region6: #{tpu_custom_call.1} parent=1 // loop_footer
      %s18 = sadd.s32 1, %s14
    $region7: #{tpu_custom_call.1} parent=1 // loop_footer_branch
      %13 = sbr.rel target = $region3
    $region8: #{tpu_custom_call.1} parent=1 // loop_exit
      _
    %526 = vsyncpa [#allocation3], 1
    %s527 = scalar_lea.sflag [#allocation3], 1
    %528 = vsyncpa %s527, 1

</llo_original>
